<compile_context>
chip_gen: v5e
topology: v5e:2x2
jax: 0.10.0
libtpu: 0.0.40
codegen_flags: <defaults>
</compile_context>

<pallas_src>
import jax
import jax.numpy as jnp
import numpy as np
from jax import lax
from jax.experimental import pallas as pl
from jax.experimental.pallas import tpu as pltpu

BN_EPS = 1e-5


def _conv_and_norm_impl(x, weight, bias, gamma, beta, *, stride, padding):
    """Forward pass of ConvAndNorm. x: (N, C, H, W) float32, NCHW."""
    N, C, H, W = x.shape
    OC, _, KH, KW = weight.shape
    OH = (H + 2 * padding - KH) // stride + 1
    OW = (W + 2 * padding - KW) // stride + 1

    # TODO(synk): only the stride-1 'same' conv (the ConvAndNorm(3x3, s=1, p=1)
    # configuration) has the fused in-kernel tap gather; other configs need a
    # strided-gather variant.
    if stride != 1 or OH != H or OW != W:
        raise NotImplementedError(
            "fused Pallas path implemented for stride=1 'same' convolutions")

    HW = H * W
    KK = KH * KW
    KKC = KK * C
    NHW = N * HW
    inv_m = 1.0 / float(NHW)

    # ---------------- wrapper-side glue (all O(input)-sized reshapes) -------
    xf = x.reshape(N * C, HW)                                  # (N*C, HW), lane-aligned
    wk = weight.transpose(0, 2, 3, 1).reshape(OC, KKC)         # col = kk*C + c
    b2 = bias.reshape(OC, 1)
    g2 = gamma.reshape(OC, 1)
    bt2 = beta.reshape(OC, 1)

    # Static validity masks, one per tap, covering BOTH row and column
    # out-of-range (so a circular lane roll + mask == zero-padded conv).
    oh_i = np.arange(H).reshape(H, 1)
    ow_i = np.arange(W).reshape(1, W)
    mask_np = np.stack(
        [((oh_i + kh - padding >= 0) & (oh_i + kh - padding < H) &
          (ow_i + kw - padding >= 0) & (ow_i + kw - padding < W)).reshape(1, HW)
         for kh in range(KH) for kw in range(KW)],
        axis=0).astype(np.float32)                             # (KK, 1, HW)
    mask = jnp.asarray(mask_np)

    # --------------------------- fused kernel -------------------------------
    def fused_kernel(x_ref, w_ref, b_ref, m_ref, g_ref, bt_ref, o_ref, slab_ref):
        x2 = x_ref[...]                                        # (N*C, HW)

        # Assemble the (KK*C, N*HW) patch slab: one aligned lane-roll + mask
        # per tap, scattered to static row/lane offsets of the VMEM scratch.
        for kh in range(KH):
            for kw in range(KW):
                kk = kh * KW + kw
                d = (kh - padding) * W + (kw - padding)        # flat tap shift
                t = pltpu.roll(x2, shift=(-d) % HW, axis=1) if d != 0 else x2
                if not (kh == padding and kw == padding):      # center mask == 1
                    t = t * m_ref[kk]                          # (N*C,HW)*(1,HW)
                for n in range(N):
                    slab_ref[kk * C:(kk + 1) * C, n * HW:(n + 1) * HW] = \
                        t[n * C:(n + 1) * C, :]

        # Single MXU dot: (OC, KK*C) @ (KK*C, N*HW), f32 accumulation.
        conv = jnp.dot(w_ref[...], slab_ref[...],
                       preferred_element_type=jnp.float32) + b_ref[...]

        # BatchNorm training statistics over (N, H, W) via XLU lane reduce.
        mean = jnp.sum(conv, axis=-1, keepdims=True) * inv_m   # (OC, 1)
        ex2 = jnp.sum(conv * conv, axis=-1, keepdims=True) * inv_m
        var = ex2 - mean * mean                                # biased var
        inv_std = lax.rsqrt(var + BN_EPS)
        scale = g_ref[...] * inv_std
        shift_v = bt_ref[...] - mean * scale

        y = jnp.maximum(conv * scale + shift_v, 0.0)           # (OC, N*HW)
        for n in range(N):                                     # aligned lane slices
            o_ref[n] = y[:, n * HW:(n + 1) * HW]

    cparams = pltpu.CompilerParams(
        dimension_semantics=("arbitrary",),
        vmem_limit_bytes=4 * 1024 * 1024,                      # usage is ~100 KiB
    )

    y_flat = pl.pallas_call(
        fused_kernel,
        out_shape=jax.ShapeDtypeStruct((N, OC, HW), jnp.float32),
        grid=(1,),
        in_specs=[
            pl.BlockSpec((N * C, HW), lambda i: (0, 0)),
            pl.BlockSpec((OC, KKC), lambda i: (0, 0)),
            pl.BlockSpec((OC, 1), lambda i: (0, 0)),
            pl.BlockSpec((KK, 1, HW), lambda i: (0, 0, 0)),
            pl.BlockSpec((OC, 1), lambda i: (0, 0)),
            pl.BlockSpec((OC, 1), lambda i: (0, 0)),
        ],
        out_specs=pl.BlockSpec((N, OC, HW), lambda i: (0, 0, 0)),
        scratch_shapes=[pltpu.VMEM((KKC, NHW), jnp.float32)],
        compiler_params=cparams,
        cost_estimate=pl.CostEstimate(
            flops=2 * OC * KKC * NHW + 6 * OC * NHW,
            transcendentals=OC,
            bytes_accessed=4 * (N * C * HW + OC * KKC + 3 * OC
                                + KK * HW + N * OC * HW),
        ),
    )(xf, wk, b2, mask, g2, bt2)

    # (N, OC, OH*OW) -> NCHW is a pure reshape (no transpose pass).
    return y_flat.reshape(N, OC, OH, OW)


conv_and_norm = jax.jit(_conv_and_norm_impl, static_argnames=("stride", "padding"))


def reference(x, weight, bias, gamma, beta, *, stride, padding):
    conv = lax.conv_general_dilated(
        x, weight, (stride, stride),
        [(padding, padding), (padding, padding)],
        dimension_numbers=("NCHW", "OIHW", "NCHW"),
    ) + bias.reshape(1, -1, 1, 1)
    mean = conv.mean(axis=(0, 2, 3), keepdims=True)
    var = conv.var(axis=(0, 2, 3), keepdims=True)   # biased, matches BN training
    y = (conv - mean) * lax.rsqrt(var + BN_EPS) * gamma.reshape(1, -1, 1, 1) \
        + beta.reshape(1, -1, 1, 1)
    return jnp.maximum(y, 0.0)


if __name__ == "__main__":
    key = jax.random.PRNGKey(0)
    kx, kw, kb, kg, kbt = jax.random.split(key, 5)

    # ConvAndNorm(in_channle=4, out_channle=8, stride=1, filters=3, paddings=1)
    N, C, H, W = 2, 4, 16, 16
    OC, KH, KW, stride, padding = 8, 3, 3, 1, 1

    x = jax.random.normal(kx, (N, C, H, W), jnp.float32)

    fan_in = C * KH * KW
    bound = 1.0 / (fan_in ** 0.5)
    weight = jax.random.uniform(kw, (OC, C, KH, KW), jnp.float32, -bound, bound)
    bias = jax.random.uniform(kb, (OC,), jnp.float32, -bound, bound)
    gamma = 1.0 + 0.1 * jax.random.normal(kg, (OC,), jnp.float32)
    beta = 0.1 * jax.random.normal(kbt, (OC,), jnp.float32)

    y = conv_and_norm(x, weight, bias, gamma, beta, stride=stride, padding=padding)
    y = jax.block_until_ready(y)

    y_ref = reference(x, weight, bias, gamma, beta, stride=stride, padding=padding)
    assert y.shape == (N, OC, H, W)
    assert jnp.allclose(y, y_ref, atol=1e-4, rtol=1e-4), "mismatch vs JAX reference"

    print("KERNEL_OK")
</pallas_src>

<mosaic_0001>
module attributes {stable_mosaic.version = 11 : i64} {
  func.func @fused_kernel(%arg0: i32, %arg1: memref<8x256xf32, #tpu.memory_space<vmem>>, %arg2: memref<8x36xf32, #tpu.memory_space<vmem>>, %arg3: memref<8x1xf32, #tpu.memory_space<vmem>>, %arg4: memref<9x1x256xf32, #tpu.memory_space<vmem>>, %arg5: memref<8x1xf32, #tpu.memory_space<vmem>>, %arg6: memref<8x1xf32, #tpu.memory_space<vmem>>, %arg7: memref<2x8x256xf32, #tpu.memory_space<vmem>>, %arg8: memref<36x512xf32, #tpu.memory_space<vmem>>) attributes {dimension_semantics = [#tpu.dimension_semantics<arbitrary>], iteration_bounds = array<i64: 1>, scalar_prefetch = 0 : i64, scratch_operands = 1 : i64, tpu.core_type = #tpu.core_type<tc>, window_params = [{pipeline_mode = #tpu.pipeline_mode<synchronous>, transform_indices = @transform_0, window_bounds = array<i64: 8, 256>}, {pipeline_mode = #tpu.pipeline_mode<synchronous>, transform_indices = @transform_1, window_bounds = array<i64: 8, 36>}, {pipeline_mode = #tpu.pipeline_mode<synchronous>, transform_indices = @transform_2, window_bounds = array<i64: 8, 1>}, {pipeline_mode = #tpu.pipeline_mode<synchronous>, transform_indices = @transform_3, window_bounds = array<i64: 9, 1, 256>}, {pipeline_mode = #tpu.pipeline_mode<synchronous>, transform_indices = @transform_4, window_bounds = array<i64: 8, 1>}, {pipeline_mode = #tpu.pipeline_mode<synchronous>, transform_indices = @transform_5, window_bounds = array<i64: 8, 1>}, {pipeline_mode = #tpu.pipeline_mode<synchronous>, transform_indices = @transform_6, window_bounds = array<i64: 2, 8, 256>}]} {
    %c0 = arith.constant 0 : index
    %c0_0 = arith.constant 0 : index
    %0 = vector.load %arg1[%c0, %c0_0] : memref<8x256xf32, #tpu.memory_space<vmem>>, vector<8x256xf32>
    %c17_i32 = arith.constant 17 : i32
    %1 = tpu.dynamic_rotate %0 by %c17_i32 dim 1 : vector<8x256xf32>, i32 -> vector<8x256xf32>
    %c0_1 = arith.constant 0 : index
    %c0_2 = arith.constant 0 : index
    %c0_3 = arith.constant 0 : index
    %2 = vector.load %arg4[%c0_1, %c0_2, %c0_3] : memref<9x1x256xf32, #tpu.memory_space<vmem>>, vector<1x1x256xf32>
    %3 = vector.shape_cast %2 : vector<1x1x256xf32> to vector<1x256xf32>
    %4 = vector.broadcast %3 : vector<1x256xf32> to vector<8x256xf32>
    %5 = arith.mulf %1, %4 : vector<8x256xf32>
    %6 = vector.extract_strided_slice %5 {offsets = [0, 0], sizes = [4, 256], strides = [1, 1]} : vector<8x256xf32> to vector<4x256xf32>
    %c0_4 = arith.constant 0 : index
    %c0_5 = arith.constant 0 : index
    %7 = vector.load %arg8[%c0_4, %c0_5] : memref<36x512xf32, #tpu.memory_space<vmem>>, vector<4x256xf32>
    tpu.vector_store %arg8[%c0_4, %c0_5], %6 {strides = array<i32>} : memref<36x512xf32, #tpu.memory_space<vmem>>, vector<4x256xf32>,
    %8 = vector.extract_strided_slice %5 {offsets = [4, 0], sizes = [4, 256], strides = [1, 1]} : vector<8x256xf32> to vector<4x256xf32>
    %c0_6 = arith.constant 0 : index
    %c256 = arith.constant 256 : index
    %9 = vector.load %arg8[%c0_6, %c256] : memref<36x512xf32, #tpu.memory_space<vmem>>, vector<4x256xf32>
    tpu.vector_store %arg8[%c0_6, %c256], %8 {strides = array<i32>} : memref<36x512xf32, #tpu.memory_space<vmem>>, vector<4x256xf32>,
    %c16_i32 = arith.constant 16 : i32
    %10 = tpu.dynamic_rotate %0 by %c16_i32 dim 1 : vector<8x256xf32>, i32 -> vector<8x256xf32>
    %c1 = arith.constant 1 : index
    %c0_7 = arith.constant 0 : index
    %c0_8 = arith.constant 0 : index
    %11 = vector.load %arg4[%c1, %c0_7, %c0_8] : memref<9x1x256xf32, #tpu.memory_space<vmem>>, vector<1x1x256xf32>
    %12 = vector.shape_cast %11 : vector<1x1x256xf32> to vector<1x256xf32>
    %13 = vector.broadcast %12 : vector<1x256xf32> to vector<8x256xf32>
    %14 = arith.mulf %10, %13 : vector<8x256xf32>
    %15 = vector.extract_strided_slice %14 {offsets = [0, 0], sizes = [4, 256], strides = [1, 1]} : vector<8x256xf32> to vector<4x256xf32>
    %c4 = arith.constant 4 : index
    %c0_9 = arith.constant 0 : index
    %16 = vector.load %arg8[%c4, %c0_9] : memref<36x512xf32, #tpu.memory_space<vmem>>, vector<4x256xf32>
    tpu.vector_store %arg8[%c4, %c0_9], %15 {strides = array<i32>} : memref<36x512xf32, #tpu.memory_space<vmem>>, vector<4x256xf32>,
    %17 = vector.extract_strided_slice %14 {offsets = [4, 0], sizes = [4, 256], strides = [1, 1]} : vector<8x256xf32> to vector<4x256xf32>
    %c4_10 = arith.constant 4 : index
    %c256_11 = arith.constant 256 : index
    %18 = vector.load %arg8[%c4_10, %c256_11] : memref<36x512xf32, #tpu.memory_space<vmem>>, vector<4x256xf32>
    tpu.vector_store %arg8[%c4_10, %c256_11], %17 {strides = array<i32>} : memref<36x512xf32, #tpu.memory_space<vmem>>, vector<4x256xf32>,
    %c15_i32 = arith.constant 15 : i32
    %19 = tpu.dynamic_rotate %0 by %c15_i32 dim 1 : vector<8x256xf32>, i32 -> vector<8x256xf32>
    %c2 = arith.constant 2 : index
    %c0_12 = arith.constant 0 : index
    %c0_13 = arith.constant 0 : index
    %20 = vector.load %arg4[%c2, %c0_12, %c0_13] : memref<9x1x256xf32, #tpu.memory_space<vmem>>, vector<1x1x256xf32>
    %21 = vector.shape_cast %20 : vector<1x1x256xf32> to vector<1x256xf32>
    %22 = vector.broadcast %21 : vector<1x256xf32> to vector<8x256xf32>
    %23 = arith.mulf %19, %22 : vector<8x256xf32>
    %24 = vector.extract_strided_slice %23 {offsets = [0, 0], sizes = [4, 256], strides = [1, 1]} : vector<8x256xf32> to vector<4x256xf32>
    %c8 = arith.constant 8 : index
    %c0_14 = arith.constant 0 : index
    %25 = vector.load %arg8[%c8, %c0_14] : memref<36x512xf32, #tpu.memory_space<vmem>>, vector<4x256xf32>
    tpu.vector_store %arg8[%c8, %c0_14], %24 {strides = array<i32>} : memref<36x512xf32, #tpu.memory_space<vmem>>, vector<4x256xf32>,
    %26 = vector.extract_strided_slice %23 {offsets = [4, 0], sizes = [4, 256], strides = [1, 1]} : vector<8x256xf32> to vector<4x256xf32>
    %c8_15 = arith.constant 8 : index
    %c256_16 = arith.constant 256 : index
    %27 = vector.load %arg8[%c8_15, %c256_16] : memref<36x512xf32, #tpu.memory_space<vmem>>, vector<4x256xf32>
    tpu.vector_store %arg8[%c8_15, %c256_16], %26 {strides = array<i32>} : memref<36x512xf32, #tpu.memory_space<vmem>>, vector<4x256xf32>,
    %c1_i32 = arith.constant 1 : i32
    %28 = tpu.dynamic_rotate %0 by %c1_i32 dim 1 : vector<8x256xf32>, i32 -> vector<8x256xf32>
    %c3 = arith.constant 3 : index
    %c0_17 = arith.constant 0 : index
    %c0_18 = arith.constant 0 : index
    %29 = vector.load %arg4[%c3, %c0_17, %c0_18] : memref<9x1x256xf32, #tpu.memory_space<vmem>>, vector<1x1x256xf32>
    %30 = vector.shape_cast %29 : vector<1x1x256xf32> to vector<1x256xf32>
    %31 = vector.broadcast %30 : vector<1x256xf32> to vector<8x256xf32>
    %32 = arith.mulf %28, %31 : vector<8x256xf32>
    %33 = vector.extract_strided_slice %32 {offsets = [0, 0], sizes = [4, 256], strides = [1, 1]} : vector<8x256xf32> to vector<4x256xf32>
    %c12 = arith.constant 12 : index
    %c0_19 = arith.constant 0 : index
    %34 = vector.load %arg8[%c12, %c0_19] : memref<36x512xf32, #tpu.memory_space<vmem>>, vector<4x256xf32>
    tpu.vector_store %arg8[%c12, %c0_19], %33 {strides = array<i32>} : memref<36x512xf32, #tpu.memory_space<vmem>>, vector<4x256xf32>,
    %35 = vector.extract_strided_slice %32 {offsets = [4, 0], sizes = [4, 256], strides = [1, 1]} : vector<8x256xf32> to vector<4x256xf32>
    %c12_20 = arith.constant 12 : index
    %c256_21 = arith.constant 256 : index
    %36 = vector.load %arg8[%c12_20, %c256_21] : memref<36x512xf32, #tpu.memory_space<vmem>>, vector<4x256xf32>
    tpu.vector_store %arg8[%c12_20, %c256_21], %35 {strides = array<i32>} : memref<36x512xf32, #tpu.memory_space<vmem>>, vector<4x256xf32>,
    %37 = vector.extract_strided_slice %0 {offsets = [0, 0], sizes = [4, 256], strides = [1, 1]} : vector<8x256xf32> to vector<4x256xf32>
    %c16 = arith.constant 16 : index
    %c0_22 = arith.constant 0 : index
    %38 = vector.load %arg8[%c16, %c0_22] : memref<36x512xf32, #tpu.memory_space<vmem>>, vector<4x256xf32>
    tpu.vector_store %arg8[%c16, %c0_22], %37 {strides = array<i32>} : memref<36x512xf32, #tpu.memory_space<vmem>>, vector<4x256xf32>,
    %39 = vector.extract_strided_slice %0 {offsets = [4, 0], sizes = [4, 256], strides = [1, 1]} : vector<8x256xf32> to vector<4x256xf32>
    %c16_23 = arith.constant 16 : index
    %c256_24 = arith.constant 256 : index
    %40 = vector.load %arg8[%c16_23, %c256_24] : memref<36x512xf32, #tpu.memory_space<vmem>>, vector<4x256xf32>
    tpu.vector_store %arg8[%c16_23, %c256_24], %39 {strides = array<i32>} : memref<36x512xf32, #tpu.memory_space<vmem>>, vector<4x256xf32>,
    %c255_i32 = arith.constant 255 : i32
    %41 = tpu.dynamic_rotate %0 by %c255_i32 dim 1 : vector<8x256xf32>, i32 -> vector<8x256xf32>
    %c5 = arith.constant 5 : index
    %c0_25 = arith.constant 0 : index
    %c0_26 = arith.constant 0 : index
    %42 = vector.load %arg4[%c5, %c0_25, %c0_26] : memref<9x1x256xf32, #tpu.memory_space<vmem>>, vector<1x1x256xf32>
    %43 = vector.shape_cast %42 : vector<1x1x256xf32> to vector<1x256xf32>
    %44 = vector.broadcast %43 : vector<1x256xf32> to vector<8x256xf32>
    %45 = arith.mulf %41, %44 : vector<8x256xf32>
    %46 = vector.extract_strided_slice %45 {offsets = [0, 0], sizes = [4, 256], strides = [1, 1]} : vector<8x256xf32> to vector<4x256xf32>
    %c20 = arith.constant 20 : index
    %c0_27 = arith.constant 0 : index
    %47 = vector.load %arg8[%c20, %c0_27] : memref<36x512xf32, #tpu.memory_space<vmem>>, vector<4x256xf32>
    tpu.vector_store %arg8[%c20, %c0_27], %46 {strides = array<i32>} : memref<36x512xf32, #tpu.memory_space<vmem>>, vector<4x256xf32>,
    %48 = vector.extract_strided_slice %45 {offsets = [4, 0], sizes = [4, 256], strides = [1, 1]} : vector<8x256xf32> to vector<4x256xf32>
    %c20_28 = arith.constant 20 : index
    %c256_29 = arith.constant 256 : index
    %49 = vector.load %arg8[%c20_28, %c256_29] : memref<36x512xf32, #tpu.memory_space<vmem>>, vector<4x256xf32>
    tpu.vector_store %arg8[%c20_28, %c256_29], %48 {strides = array<i32>} : memref<36x512xf32, #tpu.memory_space<vmem>>, vector<4x256xf32>,
    %c241_i32 = arith.constant 241 : i32
    %50 = tpu.dynamic_rotate %0 by %c241_i32 dim 1 : vector<8x256xf32>, i32 -> vector<8x256xf32>
    %c6 = arith.constant 6 : index
    %c0_30 = arith.constant 0 : index
    %c0_31 = arith.constant 0 : index
    %51 = vector.load %arg4[%c6, %c0_30, %c0_31] : memref<9x1x256xf32, #tpu.memory_space<vmem>>, vector<1x1x256xf32>
    %52 = vector.shape_cast %51 : vector<1x1x256xf32> to vector<1x256xf32>
    %53 = vector.broadcast %52 : vector<1x256xf32> to vector<8x256xf32>
    %54 = arith.mulf %50, %53 : vector<8x256xf32>
    %55 = vector.extract_strided_slice %54 {offsets = [0, 0], sizes = [4, 256], strides = [1, 1]} : vector<8x256xf32> to vector<4x256xf32>
    %c24 = arith.constant 24 : index
    %c0_32 = arith.constant 0 : index
    %56 = vector.load %arg8[%c24, %c0_32] : memref<36x512xf32, #tpu.memory_space<vmem>>, vector<4x256xf32>
    tpu.vector_store %arg8[%c24, %c0_32], %55 {strides = array<i32>} : memref<36x512xf32, #tpu.memory_space<vmem>>, vector<4x256xf32>,
    %57 = vector.extract_strided_slice %54 {offsets = [4, 0], sizes = [4, 256], strides = [1, 1]} : vector<8x256xf32> to vector<4x256xf32>
    %c24_33 = arith.constant 24 : index
    %c256_34 = arith.constant 256 : index
    %58 = vector.load %arg8[%c24_33, %c256_34] : memref<36x512xf32, #tpu.memory_space<vmem>>, vector<4x256xf32>
    tpu.vector_store %arg8[%c24_33, %c256_34], %57 {strides = array<i32>} : memref<36x512xf32, #tpu.memory_space<vmem>>, vector<4x256xf32>,
    %c240_i32 = arith.constant 240 : i32
    %59 = tpu.dynamic_rotate %0 by %c240_i32 dim 1 : vector<8x256xf32>, i32 -> vector<8x256xf32>
    %c7 = arith.constant 7 : index
    %c0_35 = arith.constant 0 : index
    %c0_36 = arith.constant 0 : index
    %60 = vector.load %arg4[%c7, %c0_35, %c0_36] : memref<9x1x256xf32, #tpu.memory_space<vmem>>, vector<1x1x256xf32>
    %61 = vector.shape_cast %60 : vector<1x1x256xf32> to vector<1x256xf32>
    %62 = vector.broadcast %61 : vector<1x256xf32> to vector<8x256xf32>
    %63 = arith.mulf %59, %62 : vector<8x256xf32>
    %64 = vector.extract_strided_slice %63 {offsets = [0, 0], sizes = [4, 256], strides = [1, 1]} : vector<8x256xf32> to vector<4x256xf32>
    %c28 = arith.constant 28 : index
    %c0_37 = arith.constant 0 : index
    %65 = vector.load %arg8[%c28, %c0_37] : memref<36x512xf32, #tpu.memory_space<vmem>>, vector<4x256xf32>
    tpu.vector_store %arg8[%c28, %c0_37], %64 {strides = array<i32>} : memref<36x512xf32, #tpu.memory_space<vmem>>, vector<4x256xf32>,
    %66 = vector.extract_strided_slice %63 {offsets = [4, 0], sizes = [4, 256], strides = [1, 1]} : vector<8x256xf32> to vector<4x256xf32>
    %c28_38 = arith.constant 28 : index
    %c256_39 = arith.constant 256 : index
    %67 = vector.load %arg8[%c28_38, %c256_39] : memref<36x512xf32, #tpu.memory_space<vmem>>, vector<4x256xf32>
    tpu.vector_store %arg8[%c28_38, %c256_39], %66 {strides = array<i32>} : memref<36x512xf32, #tpu.memory_space<vmem>>, vector<4x256xf32>,
    %c239_i32 = arith.constant 239 : i32
    %68 = tpu.dynamic_rotate %0 by %c239_i32 dim 1 : vector<8x256xf32>, i32 -> vector<8x256xf32>
    %c8_40 = arith.constant 8 : index
    %c0_41 = arith.constant 0 : index
    %c0_42 = arith.constant 0 : index
    %69 = vector.load %arg4[%c8_40, %c0_41, %c0_42] : memref<9x1x256xf32, #tpu.memory_space<vmem>>, vector<1x1x256xf32>
    %70 = vector.shape_cast %69 : vector<1x1x256xf32> to vector<1x256xf32>
    %71 = vector.broadcast %70 : vector<1x256xf32> to vector<8x256xf32>
    %72 = arith.mulf %68, %71 : vector<8x256xf32>
    %73 = vector.extract_strided_slice %72 {offsets = [0, 0], sizes = [4, 256], strides = [1, 1]} : vector<8x256xf32> to vector<4x256xf32>
    %c32 = arith.constant 32 : index
    %c0_43 = arith.constant 0 : index
    %74 = vector.load %arg8[%c32, %c0_43] : memref<36x512xf32, #tpu.memory_space<vmem>>, vector<4x256xf32>
    tpu.vector_store %arg8[%c32, %c0_43], %73 {strides = array<i32>} : memref<36x512xf32, #tpu.memory_space<vmem>>, vector<4x256xf32>,
    %75 = vector.extract_strided_slice %72 {offsets = [4, 0], sizes = [4, 256], strides = [1, 1]} : vector<8x256xf32> to vector<4x256xf32>
    %c32_44 = arith.constant 32 : index
    %c256_45 = arith.constant 256 : index
    %76 = vector.load %arg8[%c32_44, %c256_45] : memref<36x512xf32, #tpu.memory_space<vmem>>, vector<4x256xf32>
    tpu.vector_store %arg8[%c32_44, %c256_45], %75 {strides = array<i32>} : memref<36x512xf32, #tpu.memory_space<vmem>>, vector<4x256xf32>,
    %c0_46 = arith.constant 0 : index
    %c0_47 = arith.constant 0 : index
    %77 = vector.load %arg2[%c0_46, %c0_47] : memref<8x36xf32, #tpu.memory_space<vmem>>, vector<8x36xf32>
    %c0_48 = arith.constant 0 : index
    %c0_49 = arith.constant 0 : index
    %78 = vector.load %arg8[%c0_48, %c0_49] : memref<36x512xf32, #tpu.memory_space<vmem>>, vector<36x512xf32>
    %cst = arith.constant dense<0.000000e+00> : vector<8x512xf32>
    %79 = tpu.matmul %77, %78, %cst {dimension_numbers = #tpu.dot_dimension_numbers<[1], [0], [0], [1], [0, 0, 1, 1], [], []>} : vector<8x36xf32>, vector<36x512xf32>, vector<8x512xf32> -> vector<8x512xf32>
    %c0_50 = arith.constant 0 : index
    %c0_51 = arith.constant 0 : index
    %80 = vector.load %arg3[%c0_50, %c0_51] : memref<8x1xf32, #tpu.memory_space<vmem>>, vector<8x1xf32>
    %81 = vector.broadcast %80 : vector<8x1xf32> to vector<8x512xf32>
    %82 = arith.addf %79, %81 : vector<8x512xf32>
    %cst_52 = arith.constant dense<0.000000e+00> : vector<8xf32>
    %83 = vector.multi_reduction <add>, %82, %cst_52 [1] : vector<8x512xf32> to vector<8xf32>
    %84 = vector.shape_cast %83 : vector<8xf32> to vector<8x1xf32>
    %cst_53 = arith.constant 0.001953125 : f32
    %85 = vector.broadcast %cst_53 : f32 to vector<8x1xf32>
    %86 = arith.mulf %84, %85 : vector<8x1xf32>
    %87 = arith.mulf %82, %82 : vector<8x512xf32>
    %cst_54 = arith.constant dense<0.000000e+00> : vector<8xf32>
    %88 = vector.multi_reduction <add>, %87, %cst_54 [1] : vector<8x512xf32> to vector<8xf32>
    %89 = vector.shape_cast %88 : vector<8xf32> to vector<8x1xf32>
    %cst_55 = arith.constant 0.001953125 : f32
    %90 = vector.broadcast %cst_55 : f32 to vector<8x1xf32>
    %91 = arith.mulf %89, %90 : vector<8x1xf32>
    %92 = arith.mulf %86, %86 : vector<8x1xf32>
    %93 = arith.subf %91, %92 : vector<8x1xf32>
    %cst_56 = arith.constant 9.99999974E-6 : f32
    %94 = vector.broadcast %cst_56 : f32 to vector<8x1xf32>
    %95 = arith.addf %93, %94 : vector<8x1xf32>
    %96 = math.rsqrt %95 : vector<8x1xf32>
    %c0_57 = arith.constant 0 : index
    %c0_58 = arith.constant 0 : index
    %97 = vector.load %arg5[%c0_57, %c0_58] : memref<8x1xf32, #tpu.memory_space<vmem>>, vector<8x1xf32>
    %98 = arith.mulf %97, %96 : vector<8x1xf32>
    %c0_59 = arith.constant 0 : index
    %c0_60 = arith.constant 0 : index
    %99 = vector.load %arg6[%c0_59, %c0_60] : memref<8x1xf32, #tpu.memory_space<vmem>>, vector<8x1xf32>
    %100 = arith.mulf %86, %98 : vector<8x1xf32>
    %101 = arith.subf %99, %100 : vector<8x1xf32>
    %102 = vector.broadcast %98 : vector<8x1xf32> to vector<8x512xf32>
    %103 = arith.mulf %82, %102 : vector<8x512xf32>
    %104 = vector.broadcast %101 : vector<8x1xf32> to vector<8x512xf32>
    %105 = arith.addf %103, %104 : vector<8x512xf32>
    %cst_61 = arith.constant 0.000000e+00 : f32
    %106 = vector.broadcast %cst_61 : f32 to vector<8x512xf32>
    %107 = arith.maximumf %105, %106 : vector<8x512xf32>
    %108 = vector.extract_strided_slice %107 {offsets = [0, 0], sizes = [8, 256], strides = [1, 1]} : vector<8x512xf32> to vector<8x256xf32>
    %c0_62 = arith.constant 0 : index
    %c0_63 = arith.constant 0 : index
    %c0_64 = arith.constant 0 : index
    %109 = vector.load %arg7[%c0_62, %c0_63, %c0_64] : memref<2x8x256xf32, #tpu.memory_space<vmem>>, vector<1x8x256xf32>
    %110 = vector.shape_cast %109 : vector<1x8x256xf32> to vector<8x256xf32>
    %111 = vector.shape_cast %108 : vector<8x256xf32> to vector<1x8x256xf32>
    tpu.vector_store %arg7[%c0_62, %c0_63, %c0_64], %111 {strides = array<i32>} : memref<2x8x256xf32, #tpu.memory_space<vmem>>, vector<1x8x256xf32>,
    %112 = vector.extract_strided_slice %107 {offsets = [0, 256], sizes = [8, 256], strides = [1, 1]} : vector<8x512xf32> to vector<8x256xf32>
    %c1_65 = arith.constant 1 : index
    %c0_66 = arith.constant 0 : index
    %c0_67 = arith.constant 0 : index
    %113 = vector.load %arg7[%c1_65, %c0_66, %c0_67] : memref<2x8x256xf32, #tpu.memory_space<vmem>>, vector<1x8x256xf32>
    %114 = vector.shape_cast %113 : vector<1x8x256xf32> to vector<8x256xf32>
    %115 = vector.shape_cast %112 : vector<8x256xf32> to vector<1x8x256xf32>
    tpu.vector_store %arg7[%c1_65, %c0_66, %c0_67], %115 {strides = array<i32>} : memref<2x8x256xf32, #tpu.memory_space<vmem>>, vector<1x8x256xf32>,
    return
  }
  func.func @transform_0(%arg0: i32) -> (i32, i32) {
    %c0_i32 = arith.constant 0 : i32
    %c0_i32_0 = arith.constant 0 : i32
    %c0_i32_1 = arith.constant 0 : i32
    return %c0_i32, %c0_i32_0 : i32, i32
  }
  func.func @transform_1(%arg0: i32) -> (i32, i32) {
    %c0_i32 = arith.constant 0 : i32
    %c0_i32_0 = arith.constant 0 : i32
    %c0_i32_1 = arith.constant 0 : i32
    return %c0_i32, %c0_i32_0 : i32, i32
  }
  func.func @transform_2(%arg0: i32) -> (i32, i32) {
    %c0_i32 = arith.constant 0 : i32
    %c0_i32_0 = arith.constant 0 : i32
    %c0_i32_1 = arith.constant 0 : i32
    return %c0_i32, %c0_i32_0 : i32, i32
  }
  func.func @transform_3(%arg0: i32) -> (i32, i32, i32) {
    %c0_i32 = arith.constant 0 : i32
    %c0_i32_0 = arith.constant 0 : i32
    %c0_i32_1 = arith.constant 0 : i32
    %c0_i32_2 = arith.constant 0 : i32
    return %c0_i32, %c0_i32_0, %c0_i32_1 : i32, i32, i32
  }
  func.func @transform_4(%arg0: i32) -> (i32, i32) {
    %c0_i32 = arith.constant 0 : i32
    %c0_i32_0 = arith.constant 0 : i32
    %c0_i32_1 = arith.constant 0 : i32
    return %c0_i32, %c0_i32_0 : i32, i32
  }
  func.func @transform_5(%arg0: i32) -> (i32, i32) {
    %c0_i32 = arith.constant 0 : i32
    %c0_i32_0 = arith.constant 0 : i32
    %c0_i32_1 = arith.constant 0 : i32
    return %c0_i32, %c0_i32_0 : i32, i32
  }
  func.func @transform_6(%arg0: i32) -> (i32, i32, i32) {
    %c0_i32 = arith.constant 0 : i32
    %c0_i32_0 = arith.constant 0 : i32
    %c0_i32_1 = arith.constant 0 : i32
    %c0_i32_2 = arith.constant 0 : i32
    return %c0_i32, %c0_i32_0, %c0_i32_1 : i32, i32, i32
  }
}

</mosaic_0001>

<llo_original>
// kernel: _conv_and_norm_impl.1
$region0: #{_conv_and_norm_impl.1}
  #allocation0 [shape = 'u32[]', space=smem, size = 0x4, offset = 0x4, fixed_abs, tag = 'smem constant byte address 0x4 - core index']
  #allocation1 [shape = 'u32[72,128]{1,0:T(1,128)}', space=vmem, size = 0x9000, scoped, tag = 'internal scratch']
  #allocation2 [shape = 'f32[36,512]{1,0:T(8,128)}', space=vmem, size = 0x14000, scoped, tag = 'scratch operand']
  %s0 = inlined_call_operand.vmem [shape: f32[8,256], index: 0, kind: input, shape index: {}]
  %s1 = inlined_call_operand.vmem [shape: f32[8,36], index: 1, kind: input, shape index: {}]
  %s2 = inlined_call_operand.vmem [shape: f32[8,1], index: 2, kind: input, shape index: {}]
  %s3 = inlined_call_operand.vmem [shape: f32[9,1,256], index: 3, kind: input, shape index: {}]
  %s4 = inlined_call_operand.vmem [shape: f32[8,1], index: 4, kind: input, shape index: {}]
  %s5 = inlined_call_operand.vmem [shape: f32[8,1], index: 5, kind: input, shape index: {}]
  %s6 = inlined_call_operand.vmem [shape: f32[2,8,256], index: 6, kind: output, shape index: {}]
  %s7 = sld [smem:[#allocation0]]
  $region34: #{_conv_and_norm_impl.1} parent=0
    _
  %s9 = ssub.s32 1, %s7
  %s10 = scalar_select 0, %s9, %s7
  // Predicated region
  $region2: #{_conv_and_norm_impl.1} parent=0 // pred_check
    _
  $region3: #{_conv_and_norm_impl.1} parent=0 // pred_check_branch
    %12 = sbr.rel (0) target = $region5
  $region4: #{_conv_and_norm_impl.1} parent=0 // pred_region
    _
  $region5: #{_conv_and_norm_impl.1} parent=0 // pred_fallthru
    _
  // Predicated region
  $region6: #{_conv_and_norm_impl.1} parent=0 // pred_check
    _
  $region7: #{_conv_and_norm_impl.1} parent=0 // pred_check_branch
    %14 = sbr.rel (0) target = $region9
  $region8: #{_conv_and_norm_impl.1} parent=0 // pred_region
    _
  $region9: #{_conv_and_norm_impl.1} parent=0 // pred_fallthru
    _
  // Predicated region
  $region10: #{_conv_and_norm_impl.1} parent=0 // pred_check
    _
  $region11: #{_conv_and_norm_impl.1} parent=0 // pred_check_branch
    %16 = sbr.rel (0) target = $region13
  $region12: #{_conv_and_norm_impl.1} parent=0 // pred_region
    _
  $region13: #{_conv_and_norm_impl.1} parent=0 // pred_fallthru
    _
  // Predicated region
  $region14: #{_conv_and_norm_impl.1} parent=0 // pred_check
    _
  $region15: #{_conv_and_norm_impl.1} parent=0 // pred_check_branch
    %18 = sbr.rel (0) target = $region17
  $region16: #{_conv_and_norm_impl.1} parent=0 // pred_region
    _
  $region17: #{_conv_and_norm_impl.1} parent=0 // pred_fallthru
    _
  // Predicated region
  $region18: #{_conv_and_norm_impl.1} parent=0 // pred_check
    _
  $region19: #{_conv_and_norm_impl.1} parent=0 // pred_check_branch
    %20 = sbr.rel (0) target = $region21
  $region20: #{_conv_and_norm_impl.1} parent=0 // pred_region
    _
  $region21: #{_conv_and_norm_impl.1} parent=0 // pred_fallthru
    _
  // Predicated region
  $region22: #{_conv_and_norm_impl.1} parent=0 // pred_check
    _
  $region23: #{_conv_and_norm_impl.1} parent=0 // pred_check_branch
    %22 = sbr.rel (0) target = $region25
  $region24: #{_conv_and_norm_impl.1} parent=0 // pred_region
    _
  $region25: #{_conv_and_norm_impl.1} parent=0 // pred_fallthru
    _
  %v23 = vld [vmem:[%s0] sm:$0xff]
  %v24 = vld [vmem:[%s0 + $0x8] sm:$0xff]
  %25 = vrot.lane.b32.xlu0 %v23, 17
  %v26 = vpop.permute.xlu0 %25
  %27 = vrot.lane.b32.xlu0 %v24, 17
  %v28 = vpop.permute.xlu0 %27
  %v29 = vlaneseq
  %v30 = vand.u32 %v29, 127
  %vm31 = vcmp.lt.s32.totalorder %v30, 17
  %v32 = vsel %vm31, %v26, %v28
  %v33 = vsel %vm31, %v28, %v26
  %v34 = vld [vmem:[%s3] sm:$0x3]
  %v36 = vperm.slane %v34, 0
  %v37 = vperm.slane %v34, 1
  %v40 = vmul.f32 %v33, %v36
  %v41 = vmul.f32 %v32, %v37
  %42 = vst [vmem:[#allocation2] sm:$0xf] %v40
  %43 = vst [vmem:[#allocation2 + $0x8] sm:$0xf] %v41
  %v46 = vrot.slane %v40, 4
  %v47 = vrot.slane %v41, 4
  %50 = vst [vmem:[#allocation2 + $0x10] sm:$0xf] %v46
  %51 = vst [vmem:[#allocation2 + $0x18] sm:$0xf] %v47
  %52 = vrot.lane.b32.xlu0 %v23, 16
  %v53 = vpop.permute.xlu0 %52
  %54 = vrot.lane.b32.xlu0 %v24, 16
  %v55 = vpop.permute.xlu0 %54
  %vm56 = vcmp.lt.s32.totalorder %v30, 16
  %v57 = vsel %vm56, %v53, %v55
  %v58 = vsel %vm56, %v55, %v53
  %s59 = scalar_lea.vmem %s3, 2
  %v60 = vld [vmem:[%s59] sm:$0x3]
  %v62 = vperm.slane %v60, 0
  %v63 = vperm.slane %v60, 1
  %v66 = vmul.f32 %v58, %v62
  %v67 = vmul.f32 %v57, %v63
  %v70 = vrot.slane %v66, 4
  %v71 = vrot.slane %v67, 4
  %74 = vst [vmem:[#allocation2] sm:$0xf0] %v70
  %75 = vst [vmem:[#allocation2 + $0x8] sm:$0xf0] %v71
  %76 = vst [vmem:[#allocation2 + $0x10] sm:$0xf0] %v66
  %77 = vst [vmem:[#allocation2 + $0x18] sm:$0xf0] %v67
  %78 = vrot.lane.b32.xlu0 %v23, 15
  %v79 = vpop.permute.xlu0 %78
  %80 = vrot.lane.b32.xlu0 %v24, 15
  %v81 = vpop.permute.xlu0 %80
  %vm82 = vcmp.lt.s32.totalorder %v30, 15
  %v83 = vsel %vm82, %v79, %v81
  %v84 = vsel %vm82, %v81, %v79
  %s85 = scalar_lea.vmem %s3, 4
  %v86 = vld [vmem:[%s85] sm:$0x3]
  %v88 = vperm.slane %v86, 0
  %v89 = vperm.slane %v86, 1
  %v92 = vmul.f32 %v84, %v88
  %v93 = vmul.f32 %v83, %v89
  %94 = vst [vmem:[#allocation2 + $0x20] sm:$0xf] %v92
  %95 = vst [vmem:[#allocation2 + $0x28] sm:$0xf] %v93
  %v98 = vrot.slane %v92, 4
  %v99 = vrot.slane %v93, 4
  %102 = vst [vmem:[#allocation2 + $0x30] sm:$0xf] %v98
  %103 = vst [vmem:[#allocation2 + $0x38] sm:$0xf] %v99
  %104 = vrot.lane.b32.xlu0 %v23, 1
  %v105 = vpop.permute.xlu0 %104
  %106 = vrot.lane.b32.xlu0 %v24, 1
  %v107 = vpop.permute.xlu0 %106
  %vm108 = vcmp.lt.s32.totalorder %v30, 1
  %v109 = vsel %vm108, %v105, %v107
  %v110 = vsel %vm108, %v107, %v105
  %s111 = scalar_lea.vmem %s3, 6
  %v112 = vld [vmem:[%s111] sm:$0x3]
  %v114 = vperm.slane %v112, 0
  %v115 = vperm.slane %v112, 1
  %v118 = vmul.f32 %v110, %v114
  %v119 = vmul.f32 %v109, %v115
  %v122 = vrot.slane %v118, 4
  %v123 = vrot.slane %v119, 4
  %126 = vst [vmem:[#allocation2 + $0x20] sm:$0xf0] %v122
  %127 = vst [vmem:[#allocation2 + $0x28] sm:$0xf0] %v123
  %128 = vst [vmem:[#allocation2 + $0x30] sm:$0xf0] %v118
  %129 = vst [vmem:[#allocation2 + $0x38] sm:$0xf0] %v119
  %130 = vst [vmem:[#allocation2 + $0x40] sm:$0xf] %v23
  %131 = vst [vmem:[#allocation2 + $0x48] sm:$0xf] %v24
  %v134 = vrot.slane %v23, 4
  %v135 = vrot.slane %v24, 4
  %138 = vst [vmem:[#allocation2 + $0x50] sm:$0xf] %v134
  %139 = vst [vmem:[#allocation2 + $0x58] sm:$0xf] %v135
  %140 = vrot.lane.b32.xlu0 %v23, 127
  %v141 = vpop.permute.xlu0 %140
  %142 = vrot.lane.b32.xlu0 %v24, 127
  %v143 = vpop.permute.xlu0 %142
  %vm144 = vcmp.lt.s32.totalorder %v30, 127
  %v145 = vsel %vm144, %v141, %v143
  %v146 = vsel %vm144, %v143, %v141
  %s147 = scalar_lea.vmem %s3, 10
  %v148 = vld [vmem:[%s147] sm:$0x3]
  %v150 = vperm.slane %v148, 0
  %v151 = vperm.slane %v148, 1
  %v154 = vmul.f32 %v145, %v150
  %v155 = vmul.f32 %v146, %v151
  %v158 = vrot.slane %v154, 4
  %v159 = vrot.slane %v155, 4
  %162 = vst [vmem:[#allocation2 + $0x40] sm:$0xf0] %v158
  %163 = vst [vmem:[#allocation2 + $0x48] sm:$0xf0] %v159
  %164 = vst [vmem:[#allocation2 + $0x50] sm:$0xf0] %v154
  %165 = vst [vmem:[#allocation2 + $0x58] sm:$0xf0] %v155
  %166 = vrot.lane.b32.xlu0 %v23, 113
  %v167 = vpop.permute.xlu0 %166
  %168 = vrot.lane.b32.xlu0 %v24, 113
  %v169 = vpop.permute.xlu0 %168
  %vm170 = vcmp.lt.s32.totalorder %v30, 113
  %v171 = vsel %vm170, %v167, %v169
  %v172 = vsel %vm170, %v169, %v167
  %s173 = scalar_lea.vmem %s3, 12
  %v174 = vld [vmem:[%s173] sm:$0x3]
  %v176 = vperm.slane %v174, 0
  %v177 = vperm.slane %v174, 1
  %v180 = vmul.f32 %v171, %v176
  %v181 = vmul.f32 %v172, %v177
  %182 = vst [vmem:[#allocation2 + $0x60] sm:$0xf] %v180
  %183 = vst [vmem:[#allocation2 + $0x68] sm:$0xf] %v181
  %v186 = vrot.slane %v180, 4
  %v187 = vrot.slane %v181, 4
  %190 = vst [vmem:[#allocation2 + $0x70] sm:$0xf] %v186
  %191 = vst [vmem:[#allocation2 + $0x78] sm:$0xf] %v187
  %192 = vrot.lane.b32.xlu0 %v23, 112
  %v193 = vpop.permute.xlu0 %192
  %194 = vrot.lane.b32.xlu0 %v24, 112
  %v195 = vpop.permute.xlu0 %194
  %vm196 = vcmp.lt.s32.totalorder %v30, 112
  %v197 = vsel %vm196, %v193, %v195
  %v198 = vsel %vm196, %v195, %v193
  %s199 = scalar_lea.vmem %s3, 14
  %v200 = vld [vmem:[%s199] sm:$0x3]
  %v202 = vperm.slane %v200, 0
  %v203 = vperm.slane %v200, 1
  %v206 = vmul.f32 %v197, %v202
  %v207 = vmul.f32 %v198, %v203
  %v210 = vrot.slane %v206, 4
  %v211 = vrot.slane %v207, 4
  %214 = vst [vmem:[#allocation2 + $0x60] sm:$0xf0] %v210
  %215 = vst [vmem:[#allocation2 + $0x68] sm:$0xf0] %v211
  %216 = vst [vmem:[#allocation2 + $0x70] sm:$0xf0] %v206
  %217 = vst [vmem:[#allocation2 + $0x78] sm:$0xf0] %v207
  %218 = vrot.lane.b32.xlu0 %v23, 111
  %v219 = vpop.permute.xlu0 %218
  %220 = vrot.lane.b32.xlu0 %v24, 111
  %v221 = vpop.permute.xlu0 %220
  %vm222 = vcmp.lt.s32.totalorder %v30, 111
  %v223 = vsel %vm222, %v219, %v221
  %v224 = vsel %vm222, %v221, %v219
  %s225 = scalar_lea.vmem %s3, 16
  %v226 = vld [vmem:[%s225] sm:$0x3]
  %v228 = vperm.slane %v226, 0
  %v229 = vperm.slane %v226, 1
  %v232 = vmul.f32 %v223, %v228
  %v233 = vmul.f32 %v224, %v229
  %234 = vst [vmem:[#allocation2 + $0x80] sm:$0xf] %v232
  %235 = vst [vmem:[#allocation2 + $0x88] sm:$0xf] %v233
  %v238 = vrot.slane %v232, 4
  %v239 = vrot.slane %v233, 4
  %242 = vst [vmem:[#allocation2 + $0x90] sm:$0xf] %v238
  %243 = vst [vmem:[#allocation2 + $0x98] sm:$0xf] %v239
  %v244 = vld [vmem:[%s1] sm:$0xff]
  %v245 = vld [vmem:[#allocation2] sm:$0xff]
  %v246 = vld [vmem:[#allocation2 + $0x8] sm:$0xff]
  %v247 = vld [vmem:[#allocation2 + $0x10] sm:$0xff]
  %v248 = vld [vmem:[#allocation2 + $0x18] sm:$0xff]
  %v249 = vld [vmem:[#allocation2 + $0x20] sm:$0xff]
  %v250 = vld [vmem:[#allocation2 + $0x28] sm:$0xff]
  %v251 = vld [vmem:[#allocation2 + $0x30] sm:$0xff]
  %v252 = vld [vmem:[#allocation2 + $0x38] sm:$0xff]
  %v253 = vld [vmem:[#allocation2 + $0x40] sm:$0xff]
  %v254 = vld [vmem:[#allocation2 + $0x48] sm:$0xff]
  %v255 = vld [vmem:[#allocation2 + $0x50] sm:$0xff]
  %v256 = vld [vmem:[#allocation2 + $0x58] sm:$0xff]
  %v257 = vld [vmem:[#allocation2 + $0x60] sm:$0xff]
  %v258 = vld [vmem:[#allocation2 + $0x68] sm:$0xff]
  %v259 = vld [vmem:[#allocation2 + $0x70] sm:$0xff]
  %v260 = vld [vmem:[#allocation2 + $0x78] sm:$0xff]
  %v261 = vld [vmem:[#allocation2 + $0x80] sm:$0xf]
  %v262 = vld [vmem:[#allocation2 + $0x88] sm:$0xf]
  %v263 = vld [vmem:[#allocation2 + $0x90] sm:$0xf]
  %v264 = vld [vmem:[#allocation2 + $0x98] sm:$0xf]
  %v265 = vld [vmem:[%s2] sm:$0xff]
  %267 = vset.pattern.permute.xlu0 0
  %268 = vperm.xlu0 %267, %v265
  %v269 = vpop.permute.xlu0 %268
  %vm271 = vcmask 293888
  %v273 = vsel %vm271, %v244, 0
  %vm275 = vcmask 1043456
  %v277 = vsel %vm275, %v261, 0
  %v280 = vsel %vm275, %v262, 0
  %v283 = vsel %vm275, %v263, 0
  %v286 = vsel %vm275, %v264, 0
  %288 = vmatpush.msra.mxu0 0.0
  %289 = vmatpush.msra.mxu0 0.0
  %290 = vmatpush.msra.mxu0 0.0
  %291 = vmatpush.msra.mxu0 0.0
  %292 = vmatpush.msra.mxu0 0.0
  %293 = vmatpush.msra.mxu0 0.0
  %294 = vmatpush.msra.mxu0 0.0
  %295 = vmatpush.msra.mxu0 0.0
  %296 = vmatpush.msra.mxu0 0.0
  %297 = vmatpush.msra.mxu0 0.0
  %298 = vmatpush.msra.mxu0 0.0
  %299 = vmatpush.msra.mxu0 %v277
  %300 = vmatpush.msra.mxu0 %v257
  %301 = vmatpush.msra.mxu0 %v253
  %302 = vmatpush.msra.mxu0 %v249
  %303 = vmatpush.msra.mxu0 %v245
  %304 = vmatmul.f32.gmra.mxu0 %v273
  %v305 = vpop.f32.mrf.mxu0
  %v306 = vadd.f32 %v269, %v305
  %307 = vdwg.mxu0
  %308 = vmatpush.msra.mxu0 0.0
  %309 = vmatpush.msra.mxu0 0.0
  %310 = vmatpush.msra.mxu0 0.0
  %311 = vmatpush.msra.mxu0 0.0
  %312 = vmatpush.msra.mxu0 0.0
  %313 = vmatpush.msra.mxu0 0.0
  %314 = vmatpush.msra.mxu0 0.0
  %315 = vmatpush.msra.mxu0 0.0
  %316 = vmatpush.msra.mxu0 0.0
  %317 = vmatpush.msra.mxu0 0.0
  %318 = vmatpush.msra.mxu0 0.0
  %319 = vmatpush.msra.mxu0 %v280
  %320 = vmatpush.msra.mxu0 %v258
  %321 = vmatpush.msra.mxu0 %v254
  %322 = vmatpush.msra.mxu0 %v250
  %323 = vmatpush.msra.mxu0 %v246
  %324 = vmatmul.f32.gmra.mxu0 %v273
  %v325 = vpop.f32.mrf.mxu0
  %v326 = vadd.f32 %v269, %v325
  %327 = vdwg.mxu0
  %328 = vmatpush.msra.mxu0 0.0
  %329 = vmatpush.msra.mxu0 0.0
  %330 = vmatpush.msra.mxu0 0.0
  %331 = vmatpush.msra.mxu0 0.0
  %332 = vmatpush.msra.mxu0 0.0
  %333 = vmatpush.msra.mxu0 0.0
  %334 = vmatpush.msra.mxu0 0.0
  %335 = vmatpush.msra.mxu0 0.0
  %336 = vmatpush.msra.mxu0 0.0
  %337 = vmatpush.msra.mxu0 0.0
  %338 = vmatpush.msra.mxu0 0.0
  %339 = vmatpush.msra.mxu0 %v283
  %340 = vmatpush.msra.mxu0 %v259
  %341 = vmatpush.msra.mxu0 %v255
  %342 = vmatpush.msra.mxu0 %v251
  %343 = vmatpush.msra.mxu0 %v247
  %344 = vmatmul.f32.gmra.mxu0 %v273
  %v345 = vpop.f32.mrf.mxu0
  %v346 = vadd.f32 %v269, %v345
  %347 = vdwg.mxu0
  %348 = vmatpush.msra.mxu0 0.0
  %349 = vmatpush.msra.mxu0 0.0
  %350 = vmatpush.msra.mxu0 0.0
  %351 = vmatpush.msra.mxu0 0.0
  %352 = vmatpush.msra.mxu0 0.0
  %353 = vmatpush.msra.mxu0 0.0
  %354 = vmatpush.msra.mxu0 0.0
  %355 = vmatpush.msra.mxu0 0.0
  %356 = vmatpush.msra.mxu0 0.0
  %357 = vmatpush.msra.mxu0 0.0
  %358 = vmatpush.msra.mxu0 0.0
  %359 = vmatpush.msra.mxu0 %v286
  %360 = vmatpush.msra.mxu0 %v260
  %361 = vmatpush.msra.mxu0 %v256
  %362 = vmatpush.msra.mxu0 %v252
  %363 = vmatpush.msra.mxu0 %v248
  %364 = vmatmul.f32.gmra.mxu0 %v273
  %v365 = vpop.f32.mrf.mxu0
  %v366 = vadd.f32 %v269, %v365
  %367 = vdwg.mxu0
  %v368 = vadd.f32 %v306, %v326
  %v369 = vadd.f32 %v368, %v346
  %v370 = vadd.f32 %v369, %v366
  %371 = vadd.xlane.f32.xlu0 %v370
  %v372 = vpop.xlane.xlu0 %371
  %v373 = vmul.f32 %v372, 0.001953125
  %v374 = vmul.f32 %v306, %v306
  %v375 = vmul.f32 %v326, %v326
  %v376 = vmul.f32 %v346, %v346
  %v377 = vmul.f32 %v366, %v366
  %v378 = vadd.f32 %v374, %v375
  %v379 = vadd.f32 %v378, %v376
  %v380 = vadd.f32 %v379, %v377
  %381 = vadd.xlane.f32.xlu0 %v380
  %v382 = vpop.xlane.xlu0 %381
  %v383 = vmul.f32 %v382, 0.001953125
  %v384 = vmul.f32 %v373, %v373
  %v385 = vsub.f32 %v383, %v384
  %v386 = vadd.f32 %v385, 1e-05
  %v387 = vrsqrt.pop %v386
  %v388 = vmul.f32 %v387, %v386
  %v389 = vmul.f32 %v388, %v387
  %v390 = vmul.f32 0.5, %v389
  %v391 = vsub.f32 1.5, %v390
  %v392 = vmul.f32 %v387, %v391
  %vm393 = vweird.f32 %v386
  %vm394 = vweird.f32 %v387
  %vm395 = vmor %vm393, %vm394
  %v396 = vsel %vm395, %v387, %v392
  %v397 = vld [vmem:[%s4] sm:$0xff]
  %v398 = vmul.f32 %v397, %v396
  %v399 = vld [vmem:[%s5] sm:$0xff]
  %v400 = vmul.f32 %v373, %v398
  %v401 = vsub.f32 %v399, %v400
  %403 = vset.pattern.permute.xlu0 0
  %404 = vperm.xlu0 %403, %v398
  %v405 = vpop.permute.xlu0 %404
  %v407 = vmul.f32 %v306, %v405
  %v408 = vmul.f32 %v326, %v405
  %v409 = vmul.f32 %v346, %v405
  %v410 = vmul.f32 %v366, %v405
  %412 = vset.pattern.permute.xlu0 0
  %413 = vperm.xlu0 %412, %v401
  %v414 = vpop.permute.xlu0 %413
  %v416 = vadd.f32 %v407, %v414
  %v417 = vadd.f32 %v408, %v414
  %v418 = vadd.f32 %v409, %v414
  %v419 = vadd.f32 %v410, %v414
  %v420 = vmax.f32 %v416, 0.0
  %v421 = vmax.f32 %v417, 0.0
  %v422 = vmax.f32 %v418, 0.0
  %v423 = vmax.f32 %v419, 0.0
  %424 = vst [vmem:[%s6] sm:$0xff] %v420
  %425 = vst [vmem:[%s6 + $0x8] sm:$0xff] %v421
  %s426 = scalar_lea.vmem %s6, 16
  %427 = vst [vmem:[%s426] sm:$0xff] %v422
  %428 = vst [vmem:[%s426 + $0x8] sm:$0xff] %v423
  // Predicated region
  $region26: #{_conv_and_norm_impl.1} parent=0 // pred_check
    _
  $region27: #{_conv_and_norm_impl.1} parent=0 // pred_check_branch
    %430 = sbr.rel (0) target = $region29
  $region28: #{_conv_and_norm_impl.1} parent=0 // pred_region
    _
  $region29: #{_conv_and_norm_impl.1} parent=0 // pred_fallthru
    _
  // Predicated region
  $region30: #{_conv_and_norm_impl.1} parent=0 // pred_check
    _
  $region31: #{_conv_and_norm_impl.1} parent=0 // pred_check_branch
    %432 = sbr.rel (0) target = $region33
  $region32: #{_conv_and_norm_impl.1} parent=0 // pred_region
    _
  $region33: #{_conv_and_norm_impl.1} parent=0 // pred_fallthru
    _

</llo_original>
